<compile_context>
chip_gen: v7x
topology: tpu7x:2x2x1
jax: 0.10.0
libtpu: 0.0.40
codegen_flags: <defaults>
</compile_context>

<pallas_src>
import functools

import jax
import jax.numpy as jnp
from jax.experimental import pallas as pl
from jax.experimental.pallas import tpu as pltpu


def _round_up(n, m):
    return ((n + m - 1) // m) * m


def mlp_bc_kernel(h_ref, w_ref, vec_ref, out_ref, *, in_pad, hid_pad, n_pad,
                  batch):
    # ---- load packed operands ----
    x = h_ref[...]                                   # (B, in_pad) f32
    w1 = w_ref[0:in_pad, :]                          # (in_pad, hid_pad) f32
    w2t = w_ref[in_pad:in_pad + n_pad, :]            # (n_pad, hid_pad) f32 (PyTorch layout)
    vecs = vec_ref[...]                              # (4, vec_w) f32
    b1 = vecs[0:1, :hid_pad]                         # (1, hid_pad)
    gamma = vecs[1:2, :hid_pad]
    beta = vecs[2:3, :hid_pad]
    b2 = vecs[3:4, :n_pad]                           # (1, n_pad)

    # ---- Dropout(p=0.0) -> identity ----

    # ---- Linear 1 + ReLU (bf16 MXU operands, f32 accumulate) ----
    h1 = jnp.dot(x.astype(jnp.bfloat16), w1.astype(jnp.bfloat16),
                 preferred_element_type=jnp.float32)
    h1 = jnp.maximum(h1 + b1, 0.0)                   # (B, hid_pad) f32

    # ---- BatchNorm1d batch stats (single pass, f32) ----
    inv_b = jnp.float32(1.0 / batch)
    mean = jnp.sum(h1, axis=0, keepdims=True) * inv_b          # (1, hid_pad)
    ex2 = jnp.sum(h1 * h1, axis=0, keepdims=True) * inv_b
    var = ex2 - mean * mean
    s = gamma * jax.lax.rsqrt(var + jnp.float32(1e-5))         # (1, hid_pad)

    # ---- Fold BN affine into Linear 2 ----
    # h2 = (h1 - mean) * s + beta ; out = h2 @ w2 + b2
    #    = h1 @ (w2 * s)^T + ((beta - mean*s) @ w2^T + b2)
    w2s = w2t * s                                    # lane-broadcast row scale
    shift = beta - mean * s                          # (1, hid_pad)

    out = jnp.einsum('bh,th->bt',
                     h1.astype(jnp.bfloat16), w2s.astype(jnp.bfloat16),
                     preferred_element_type=jnp.float32)       # (B, n_pad)
    bias = jnp.einsum('ih,th->it', shift, w2t,
                      preferred_element_type=jnp.float32) + b2 # (1, n_pad)

    out_ref[...] = (out + bias).astype(out_ref.dtype)


def mlp_binary_classifier(h, params):
    """h: (B, in_feats) float32. params: w1 (in,hidden), w2 (hidden,n_tasks),
    b1/gamma/beta (hidden,), b2 (n_tasks,)."""
    B, in_feats = h.shape
    w1 = params["w1"]
    w2 = params["w2"]
    hidden = w1.shape[1]
    n_tasks = w2.shape[1]

    in_pad = _round_up(in_feats, 128)
    hid_pad = _round_up(hidden, 128)
    n_pad = _round_up(n_tasks, 128)
    vec_w = max(hid_pad, n_pad)
    f32 = jnp.float32

    # Zero padding to full 128-lane tiles (zeros do not change the math).
    h_pad = jnp.zeros((B, in_pad), f32).at[:, :in_feats].set(h.astype(f32))
    w1_pad = jnp.zeros((in_pad, hid_pad), f32).at[:in_feats, :hidden].set(w1)
    # Second linear kept in PyTorch (out, in) layout so the BN scale is a pure
    # lane-broadcast over its rows.
    w2t_pad = jnp.zeros((n_pad, hid_pad), f32).at[:n_tasks, :hidden].set(w2.T)
    weights = jnp.concatenate([w1_pad, w2t_pad], axis=0)   # (in_pad+n_pad, hid_pad)

    vecs = jnp.zeros((4, vec_w), f32)
    vecs = vecs.at[0, :hidden].set(params["b1"].reshape(-1))
    vecs = vecs.at[1, :hidden].set(params["gamma"].reshape(-1))
    vecs = vecs.at[2, :hidden].set(params["beta"].reshape(-1))
    vecs = vecs.at[3, :n_tasks].set(params["b2"].reshape(-1))

    kernel = functools.partial(mlp_bc_kernel, in_pad=in_pad, hid_pad=hid_pad,
                               n_pad=n_pad, batch=B)

    def full(shape):
        return pl.BlockSpec(shape, lambda: (0,) * len(shape))

    flops = 2 * B * in_pad * hid_pad + 2 * B * hid_pad * n_pad \
        + 2 * hid_pad * n_pad
    bytes_accessed = 4 * (h_pad.size + weights.size + vecs.size + B * n_pad)

    out_pad = pl.pallas_call(
        kernel,
        out_shape=jax.ShapeDtypeStruct((B, n_pad), f32),
        in_specs=[full(h_pad.shape), full(weights.shape), full(vecs.shape)],
        out_specs=full((B, n_pad)),
        cost_estimate=pl.CostEstimate(flops=flops, transcendentals=hid_pad,
                                      bytes_accessed=bytes_accessed),
        compiler_params=pltpu.CompilerParams(vmem_limit_bytes=32 * 1024 * 1024),
    )(h_pad, weights, vecs)

    return out_pad[:, :n_tasks].astype(h.dtype)


def init_params(key, in_feats, hidden_feats, n_tasks):
    """Deterministic init mimicking nn.Linear defaults (uniform +-1/sqrt(fan_in)).
    Linear weights stored transposed as (fan_in, fan_out)."""
    k1, k2, k3, k4 = jax.random.split(key, 4)
    lim1 = 1.0 / jnp.sqrt(in_feats)
    lim2 = 1.0 / jnp.sqrt(hidden_feats)
    return {
        "w1": jax.random.uniform(k1, (in_feats, hidden_feats), jnp.float32,
                                 -lim1, lim1),
        "b1": jax.random.uniform(k2, (hidden_feats,), jnp.float32, -lim1, lim1),
        "gamma": jnp.ones((hidden_feats,), jnp.float32),   # BatchNorm weight
        "beta": jnp.zeros((hidden_feats,), jnp.float32),   # BatchNorm bias
        "w2": jax.random.uniform(k3, (hidden_feats, n_tasks), jnp.float32,
                                 -lim2, lim2),
        "b2": jax.random.uniform(k4, (n_tasks,), jnp.float32, -lim2, lim2),
    }


if __name__ == "__main__":
    B, in_feats, hidden_feats, n_tasks = 8, 32, 32, 4

    key = jax.random.PRNGKey(0)
    k_h, k_p = jax.random.split(key)
    h = jax.random.normal(k_h, (B, in_feats), dtype=jnp.float32)
    params = init_params(k_p, in_feats, hidden_feats, n_tasks)

    out = mlp_binary_classifier(h, params)
    jax.block_until_ready(out)

    # Pure-JAX f32 reference of the module semantics (kernel uses bf16 MXU
    # operands with f32 accumulation, hence the relaxed tolerance).
    h1 = jnp.maximum(h @ params["w1"] + params["b1"], 0.0)
    mean = jnp.mean(h1, axis=0, keepdims=True)
    var = jnp.mean((h1 - mean) ** 2, axis=0, keepdims=True)
    h2 = (h1 - mean) / jnp.sqrt(var + 1e-5) * params["gamma"] + params["beta"]
    ref = h2 @ params["w2"] + params["b2"]

    assert out.shape == (B, n_tasks)
    assert jnp.allclose(out, ref, atol=5e-2, rtol=5e-2), (
        float(jnp.max(jnp.abs(out - ref))))

    print("KERNEL_OK")
</pallas_src>

<mosaic_0001>
module attributes {stable_mosaic.version = 11 : i64} {
  func.func @mlp_bc_kernel(%arg0: memref<8x128xf32, #tpu.memory_space<vmem>>, %arg1: memref<256x128xf32, #tpu.memory_space<vmem>>, %arg2: memref<4x128xf32, #tpu.memory_space<vmem>>, %arg3: memref<8x128xf32, #tpu.memory_space<vmem>>) attributes {dimension_semantics = [], scalar_prefetch = 0 : i64, scratch_operands = 0 : i64, tpu.core_type = #tpu.core_type<tc>} {
    %c0 = arith.constant 0 : index
    %c0_0 = arith.constant 0 : index
    %0 = vector.load %arg0[%c0, %c0_0] : memref<8x128xf32, #tpu.memory_space<vmem>>, vector<8x128xf32>
    %c0_1 = arith.constant 0 : index
    %c0_2 = arith.constant 0 : index
    %1 = vector.load %arg1[%c0_1, %c0_2] : memref<256x128xf32, #tpu.memory_space<vmem>>, vector<128x128xf32>
    %c128 = arith.constant 128 : index
    %c0_3 = arith.constant 0 : index
    %2 = vector.load %arg1[%c128, %c0_3] : memref<256x128xf32, #tpu.memory_space<vmem>>, vector<128x128xf32>
    %c0_4 = arith.constant 0 : index
    %c0_5 = arith.constant 0 : index
    %3 = vector.load %arg2[%c0_4, %c0_5] : memref<4x128xf32, #tpu.memory_space<vmem>>, vector<4x128xf32>
    %4 = vector.extract_strided_slice %3 {offsets = [0, 0], sizes = [1, 128], strides = [1, 1]} : vector<4x128xf32> to vector<1x128xf32>
    %5 = vector.extract_strided_slice %3 {offsets = [1, 0], sizes = [1, 128], strides = [1, 1]} : vector<4x128xf32> to vector<1x128xf32>
    %6 = vector.extract_strided_slice %3 {offsets = [2, 0], sizes = [1, 128], strides = [1, 1]} : vector<4x128xf32> to vector<1x128xf32>
    %7 = vector.extract_strided_slice %3 {offsets = [3, 0], sizes = [1, 128], strides = [1, 1]} : vector<4x128xf32> to vector<1x128xf32>
    %8 = arith.truncf %0 : vector<8x128xf32> to vector<8x128xbf16>
    %9 = arith.truncf %1 : vector<128x128xf32> to vector<128x128xbf16>
    %cst = arith.constant dense<0.000000e+00> : vector<8x128xf32>
    %10 = tpu.matmul %8, %9, %cst {dimension_numbers = #tpu.dot_dimension_numbers<[1], [0], [0], [1], [0, 0, 1, 1], [], []>} : vector<8x128xbf16>, vector<128x128xbf16>, vector<8x128xf32> -> vector<8x128xf32>
    %11 = vector.broadcast %4 : vector<1x128xf32> to vector<8x128xf32>
    %12 = arith.addf %10, %11 : vector<8x128xf32>
    %cst_6 = arith.constant 0.000000e+00 : f32
    %13 = vector.broadcast %cst_6 : f32 to vector<8x128xf32>
    %14 = arith.maximumf %12, %13 : vector<8x128xf32>
    %cst_7 = arith.constant dense<0.000000e+00> : vector<128xf32>
    %15 = vector.multi_reduction <add>, %14, %cst_7 [0] : vector<8x128xf32> to vector<128xf32>
    %16 = vector.shape_cast %15 : vector<128xf32> to vector<1x128xf32>
    %cst_8 = arith.constant 1.250000e-01 : f32
    %17 = vector.broadcast %cst_8 : f32 to vector<1x128xf32>
    %18 = arith.mulf %16, %17 : vector<1x128xf32>
    %19 = arith.mulf %14, %14 : vector<8x128xf32>
    %cst_9 = arith.constant dense<0.000000e+00> : vector<128xf32>
    %20 = vector.multi_reduction <add>, %19, %cst_9 [0] : vector<8x128xf32> to vector<128xf32>
    %21 = vector.shape_cast %20 : vector<128xf32> to vector<1x128xf32>
    %cst_10 = arith.constant 1.250000e-01 : f32
    %22 = vector.broadcast %cst_10 : f32 to vector<1x128xf32>
    %23 = arith.mulf %21, %22 : vector<1x128xf32>
    %24 = arith.mulf %18, %18 : vector<1x128xf32>
    %25 = arith.subf %23, %24 : vector<1x128xf32>
    %cst_11 = arith.constant 9.99999974E-6 : f32
    %26 = vector.broadcast %cst_11 : f32 to vector<1x128xf32>
    %27 = arith.addf %25, %26 : vector<1x128xf32>
    %28 = math.rsqrt %27 : vector<1x128xf32>
    %29 = arith.mulf %5, %28 : vector<1x128xf32>
    %30 = vector.broadcast %29 : vector<1x128xf32> to vector<128x128xf32>
    %31 = arith.mulf %2, %30 : vector<128x128xf32>
    %32 = arith.mulf %18, %29 : vector<1x128xf32>
    %33 = arith.subf %6, %32 : vector<1x128xf32>
    %34 = arith.truncf %14 : vector<8x128xf32> to vector<8x128xbf16>
    %35 = arith.truncf %31 : vector<128x128xf32> to vector<128x128xbf16>
    "tpu.trace_start"() <{level = 10 : i32, message = "bh,th->bt"}> : () -> ()
    %cst_12 = arith.constant dense<0.000000e+00> : vector<8x128xf32>
    %36 = tpu.matmul %34, %35, %cst_12 {dimension_numbers = #tpu.dot_dimension_numbers<[1], [1], [0], [0], [0, 0, 1, 0], [], []>} : vector<8x128xbf16>, vector<128x128xbf16>, vector<8x128xf32> -> vector<8x128xf32>
    "tpu.trace_stop"() : () -> ()
    "tpu.trace_start"() <{level = 10 : i32, message = "ih,th->it"}> : () -> ()
    %cst_13 = arith.constant dense<0.000000e+00> : vector<1x128xf32>
    %37 = tpu.matmul %33, %2, %cst_13 {dimension_numbers = #tpu.dot_dimension_numbers<[1], [1], [0], [0], [0, 0, 1, 0], [], []>} : vector<1x128xf32>, vector<128x128xf32>, vector<1x128xf32> -> vector<1x128xf32>
    "tpu.trace_stop"() : () -> ()
    %38 = arith.addf %37, %7 : vector<1x128xf32>
    %39 = vector.broadcast %38 : vector<1x128xf32> to vector<8x128xf32>
    %40 = arith.addf %36, %39 : vector<8x128xf32>
    %c0_14 = arith.constant 0 : index
    %c0_15 = arith.constant 0 : index
    %41 = vector.load %arg3[%c0_14, %c0_15] : memref<8x128xf32, #tpu.memory_space<vmem>>, vector<8x128xf32>
    tpu.vector_store %arg3[%c0_14, %c0_15], %40 {strides = array<i32>} : memref<8x128xf32, #tpu.memory_space<vmem>>, vector<8x128xf32>,
    return
  }
}

</mosaic_0001>

<llo_original>
// kernel: tpu_custom_call.1
$region0: #{tpu_custom_call.1}
  #allocation0 [shape = 'u32[]', space=smem, size = 0x4, offset = 0x4, fixed_abs, tag = 'smem constant byte address 0x4 - core index']
  #allocation1 [shape = 'u32[144,128]{1,0:T(1,128)}', space=vmem, size = 0x12000, scoped, tag = 'internal scratch']
  %s0 = inlined_call_operand.hbm [shape: f32[8,128], index: 0, kind: input, shape index: {}]
  %s1 = inlined_call_operand.hbm [shape: f32[256,128], index: 1, kind: input, shape index: {}]
  %s2 = inlined_call_operand.vmem [shape: f32[4,128], index: 2, kind: input, shape index: {}]
  %s3 = inlined_call_operand.hbm [shape: f32[8,128], index: 3, kind: output, shape index: {}]
  %s4 = sld [smem:[#allocation0]]
  $region30: #{tpu_custom_call.1} parent=0
    _
  %s6 = ssub.s32 1, %s4
  %s7 = scalar_select 0, %s6, %s4
  $region1: #{tpu_custom_call.1} parent=0
    #allocation2 [shape = 'u8[4096]{0}', space=vmem, size = 0x1000, scoped, tag = 'input window, operand 0, single buffered']
    #allocation3 [shape = 's32[1]{0}', space=sflag, size = 0x4, scoped, tag = 'scoped memory for tpu_custom_call.1']
    #allocation4 [shape = 's32[1]{0}', space=sflag, size = 0x4, scoped, tag = 'scoped memory for tpu_custom_call.1']
    #allocation5 [shape = 'u8[131072]{0}', space=vmem, size = 0x20000, scoped, tag = 'input window, operand 1, single buffered']
    #allocation6 [shape = 's32[1]{0}', space=sflag, size = 0x4, scoped, tag = 'scoped memory for tpu_custom_call.1']
    #allocation7 [shape = 'u8[4096]{0}', space=vmem, size = 0x1000, scoped, tag = 'output window, operand 0, single buffered']
    %8 = vsyncpa [#allocation3], 0
    %9 = vsyncpa [#allocation6], 0
    %10 = vsyncpa [#allocation4], 0
    // Predicated region
    $region2: #{tpu_custom_call.1} parent=1 // pred_check
      _
    $region3: #{tpu_custom_call.1} parent=1 // pred_check_branch
      %12 = sbr.rel (0) target = $region5
    $region4: #{tpu_custom_call.1} parent=1 // pred_region
      %s14 = ssub.s32 128, 128
      %15 = vsyncadd [#allocation3], %s14
      %s17 = sshll.u32 [#allocation2], 4
      %s18 = int_to_ptr.vmem [resolvable:$true] %s17
      %20 = dma.hbm_to_vmem [thread:$0]  %s0, 128, %s18, [#allocation3]
    $region5: #{tpu_custom_call.1} parent=1 // pred_fallthru
      _
    // Predicated region
    $region6: #{tpu_custom_call.1} parent=1 // pred_check
      _
    $region7: #{tpu_custom_call.1} parent=1 // pred_check_branch
      %22 = sbr.rel (0) target = $region9
    $region8: #{tpu_custom_call.1} parent=1 // pred_region
      %s24 = ssub.s32 4096, 4096
      %25 = vsyncadd [#allocation6], %s24
      %s26 = sshll.u32 [#allocation5], 4
      %s27 = int_to_ptr.vmem [resolvable:$true] %s26
      %32 = dma.hbm_to_vmem [thread:$0]  %s1, 4096, %s27, [#allocation6], 128, 128, 8
    $region9: #{tpu_custom_call.1} parent=1 // pred_fallthru
      _
    // Predicated region
    $region10: #{tpu_custom_call.1} parent=1 // pred_check
      _
    $region11: #{tpu_custom_call.1} parent=1 // pred_check_branch
      %34 = sbr.rel (0) target = $region13
    $region12: #{tpu_custom_call.1} parent=1 // pred_region
      _
    $region13: #{tpu_custom_call.1} parent=1 // pred_fallthru
      _
    // Predicated region
    $region14: #{tpu_custom_call.1} parent=1 // pred_check
      _
    $region15: #{tpu_custom_call.1} parent=1 // pred_check_branch
      %36 = sbr.rel (0) target = $region17
    $region16: #{tpu_custom_call.1} parent=1 // pred_region
      %37 = dma.done [#allocation3], 128
    $region17: #{tpu_custom_call.1} parent=1 // pred_fallthru
      _
    // Predicated region
    $region18: #{tpu_custom_call.1} parent=1 // pred_check
      _
    $region19: #{tpu_custom_call.1} parent=1 // pred_check_branch
      %39 = sbr.rel (0) target = $region21
    $region20: #{tpu_custom_call.1} parent=1 // pred_region
      %40 = dma.done [#allocation6], 4096
    $region21: #{tpu_custom_call.1} parent=1 // pred_fallthru
      _
    %v42 = vld [vmem:[#allocation2] sm:$0xff]
    %v43 = vld [vmem:[#allocation5] sm:$0xff]
    %v44 = vld [vmem:[#allocation5 + $0x8] sm:$0xff]
    %v45 = vld [vmem:[#allocation5 + $0x10] sm:$0xff]
    %v46 = vld [vmem:[#allocation5 + $0x18] sm:$0xff]
    %v47 = vld [vmem:[#allocation5 + $0x20] sm:$0xff]
    %v48 = vld [vmem:[#allocation5 + $0x28] sm:$0xff]
    %v49 = vld [vmem:[#allocation5 + $0x30] sm:$0xff]
    %v50 = vld [vmem:[#allocation5 + $0x38] sm:$0xff]
    %v51 = vld [vmem:[#allocation5 + $0x40] sm:$0xff]
    %v52 = vld [vmem:[#allocation5 + $0x48] sm:$0xff]
    %v53 = vld [vmem:[#allocation5 + $0x50] sm:$0xff]
    %v54 = vld [vmem:[#allocation5 + $0x58] sm:$0xff]
    %v55 = vld [vmem:[#allocation5 + $0x60] sm:$0xff]
    %v56 = vld [vmem:[#allocation5 + $0x68] sm:$0xff]
    %v57 = vld [vmem:[#allocation5 + $0x70] sm:$0xff]
    %v58 = vld [vmem:[#allocation5 + $0x78] sm:$0xff]
    %v59 = vld [vmem:[#allocation5 + $0x80] sm:$0xff]
    %v60 = vld [vmem:[#allocation5 + $0x88] sm:$0xff]
    %v61 = vld [vmem:[#allocation5 + $0x90] sm:$0xff]
    %v62 = vld [vmem:[#allocation5 + $0x98] sm:$0xff]
    %v63 = vld [vmem:[#allocation5 + $0xa0] sm:$0xff]
    %v64 = vld [vmem:[#allocation5 + $0xa8] sm:$0xff]
    %v65 = vld [vmem:[#allocation5 + $0xb0] sm:$0xff]
    %v66 = vld [vmem:[#allocation5 + $0xb8] sm:$0xff]
    %v67 = vld [vmem:[#allocation5 + $0xc0] sm:$0xff]
    %v68 = vld [vmem:[#allocation5 + $0xc8] sm:$0xff]
    %v69 = vld [vmem:[#allocation5 + $0xd0] sm:$0xff]
    %v70 = vld [vmem:[#allocation5 + $0xd8] sm:$0xff]
    %v71 = vld [vmem:[#allocation5 + $0xe0] sm:$0xff]
    %v72 = vld [vmem:[#allocation5 + $0xe8] sm:$0xff]
    %v73 = vld [vmem:[#allocation5 + $0xf0] sm:$0xff]
    %v74 = vld [vmem:[#allocation5 + $0xf8] sm:$0xff]
    %v75 = vld [vmem:[%s2] sm:$0xf]
    %v76 = vpack.c.bf16 %v42, %v42
    %v77 = vpack.c.bf16 %v44, %v43
    %v78 = vpack.c.bf16 %v46, %v45
    %v79 = vpack.c.bf16 %v48, %v47
    %v80 = vpack.c.bf16 %v50, %v49
    %v81 = vpack.c.bf16 %v52, %v51
    %v82 = vpack.c.bf16 %v54, %v53
    %v83 = vpack.c.bf16 %v56, %v55
    %v84 = vpack.c.bf16 %v58, %v57
    %v85 = vlaneseq
    %v86 = vshrl.u32 %v85, 7
    %v87 = vsub.s32 0, %v86
    %v88 = vrot.slane %v75, %v87
    %89 = vmatprep.subr.bf16.mxu0 0
    %90 = vmatpush1.bf16.msra.mxu0 %v77
    %91 = vmatprep.subr.bf16.mxu0 0
    %92 = vmatpush1.bf16.msra.mxu0 %v78
    %93 = vmatprep.subr.bf16.mxu0 0
    %94 = vmatpush1.bf16.msra.mxu0 %v79
    %95 = vmatprep.subr.bf16.mxu0 0
    %96 = vmatpush1.bf16.msra.mxu0 %v80
    %97 = vmatprep.subr.bf16.mxu0 0
    %98 = vmatpush1.bf16.msra.mxu0 %v81
    %99 = vmatprep.subr.bf16.mxu0 0
    %100 = vmatpush1.bf16.msra.mxu0 %v82
    %101 = vmatprep.subr.bf16.mxu0 0
    %102 = vmatpush1.bf16.msra.mxu0 %v83
    %103 = vmatprep.subr.bf16.mxu0 0
    %104 = vmatpush1.bf16.msra.mxu0 %v84
    %105 = vmatprep.subr.bf16.mxu0 0
    %106 = vmatpush1.bf16.msra.mxu0 0
    %107 = vmatprep.subr.bf16.mxu0 0
    %108 = vmatpush1.bf16.msra.mxu0 0
    %109 = vmatprep.subr.bf16.mxu0 0
    %110 = vmatpush1.bf16.msra.mxu0 0
    %111 = vmatprep.subr.bf16.mxu0 0
    %112 = vmatpush1.bf16.msra.mxu0 0
    %113 = vmatprep.subr.bf16.mxu0 0
    %114 = vmatpush1.bf16.msra.mxu0 0
    %115 = vmatprep.subr.bf16.mxu0 0
    %116 = vmatpush1.bf16.msra.mxu0 0
    %117 = vmatprep.subr.bf16.mxu0 0
    %118 = vmatpush1.bf16.msra.mxu0 0
    %119 = vmatprep.subr.bf16.mxu0 0
    %120 = vmatpush1.bf16.msra.mxu0 0
    %121 = vmatprep.mubr.bf16.mxu0 0
    %122 = vmatmul.mubr.bf16.gmra.mrb[0].mxu0 %v76
    %v123 = vpop.f32.mrb[0].mxu0
    %v124 = vadd.f32 %v88, %v123
    %v125 = vpop.f32.mrb[0].mxu0
    %v126 = vpop.f32.mrb[0].mxu0
    %v127 = vpop.f32.mrb[0].mxu0
    %128 = vdwg.mxu0
    %v129 = vmax.f32 %v124, 0.0
    %v130 = vrot.slane %v129, 4
    %v131 = vadd.f32 %v129, %v130
    %v132 = vrot.slane %v131, 2
    %v133 = vadd.f32 %v131, %v132
    %v134 = vrot.slane %v133, 1
    %v135 = vadd.f32 %v133, %v134
    %v136 = vmul.f32 %v135, 0.125
    %v137 = vmul.f32 %v129, %v129
    %v138 = vrot.slane %v137, 4
    %v139 = vadd.f32 %v137, %v138
    %v140 = vrot.slane %v139, 2
    %v141 = vadd.f32 %v139, %v140
    %v142 = vrot.slane %v141, 1
    %v143 = vadd.f32 %v141, %v142
    %v144 = vmul.f32 %v143, 0.125
    %v145 = vmul.f32 %v136, %v136
    %v146 = vsub.f32 %v144, %v145
    %v147 = vadd.f32 %v146, 1e-05
    %v148 = vrsqrt.pop %v147
    %v149 = vmul.f32 %v75, %v148
    %v150 = vlaneseq
    %v151 = vshrl.u32 %v150, 7
    %v152 = vsub.s32 1, %v151
    %v153 = vrot.slane %v149, %v152
    %v154 = vmul.f32 %v59, %v153
    %v155 = vmul.f32 %v60, %v153
    %v156 = vmul.f32 %v61, %v153
    %v157 = vmul.f32 %v62, %v153
    %v158 = vmul.f32 %v63, %v153
    %v159 = vmul.f32 %v64, %v153
    %v160 = vmul.f32 %v65, %v153
    %v161 = vmul.f32 %v66, %v153
    %v162 = vmul.f32 %v67, %v153
    %v163 = vmul.f32 %v68, %v153
    %v164 = vmul.f32 %v69, %v153
    %v165 = vmul.f32 %v70, %v153
    %v166 = vmul.f32 %v71, %v153
    %v167 = vmul.f32 %v72, %v153
    %v168 = vmul.f32 %v73, %v153
    %v169 = vmul.f32 %v74, %v153
    %v170 = vmul.f32 %v136, %v149
    %v172 = vrot.slane %v170, 7
    %v174 = vsub.f32 %v75, %v172
    %v175 = vpack.c.bf16 %v129, %v129
    %v176 = vpack.c.bf16 %v155, %v154
    %v177 = vpack.c.bf16 %v157, %v156
    %v178 = vpack.c.bf16 %v159, %v158
    %v179 = vpack.c.bf16 %v161, %v160
    %v180 = vpack.c.bf16 %v163, %v162
    %v181 = vpack.c.bf16 %v165, %v164
    %v182 = vpack.c.bf16 %v167, %v166
    %v183 = vpack.c.bf16 %v169, %v168
    %v185 = vrot.slane %v174, 2
    %v188 = vrot.slane %v75, 3
    %190 = vmatprep.subr.mxu0 0.0
    %191 = vmatpush1.xpose.msra.mxu0 %v59
    %192 = vmatprep.subr.mxu0 0.0
    %193 = vmatpush1.xpose.msra.mxu0 %v60
    %194 = vmatprep.subr.mxu0 0.0
    %195 = vmatpush1.xpose.msra.mxu0 %v61
    %196 = vmatprep.subr.mxu0 0.0
    %197 = vmatpush1.xpose.msra.mxu0 %v62
    %198 = vmatprep.subr.mxu0 0.0
    %199 = vmatpush1.xpose.msra.mxu0 %v63
    %200 = vmatprep.subr.mxu0 0.0
    %201 = vmatpush1.xpose.msra.mxu0 %v64
    %202 = vmatprep.subr.mxu0 0.0
    %203 = vmatpush1.xpose.msra.mxu0 %v65
    %204 = vmatprep.subr.mxu0 0.0
    %205 = vmatpush1.xpose.msra.mxu0 %v66
    %206 = vmatprep.subr.mxu0 0.0
    %207 = vmatpush1.xpose.msra.mxu0 %v67
    %208 = vmatprep.subr.mxu0 0.0
    %209 = vmatpush1.xpose.msra.mxu0 %v68
    %210 = vmatprep.subr.mxu0 0.0
    %211 = vmatpush1.xpose.msra.mxu0 %v69
    %212 = vmatprep.subr.mxu0 0.0
    %213 = vmatpush1.xpose.msra.mxu0 %v70
    %214 = vmatprep.subr.mxu0 0.0
    %215 = vmatpush1.xpose.msra.mxu0 %v71
    %216 = vmatprep.subr.mxu0 0.0
    %217 = vmatpush1.xpose.msra.mxu0 %v72
    %218 = vmatprep.subr.mxu0 0.0
    %219 = vmatpush1.xpose.msra.mxu0 %v73
    %220 = vmatprep.subr.mxu0 0.0
    %221 = vmatpush1.xpose.msra.mxu0 %v74
    %222 = vmatprep.subr.mxu0 0.0
    %223 = vmatpush1.xpose.msra.mxu0 0.0
    %224 = vmatprep.subr.mxu0 0.0
    %225 = vmatpush1.xpose.msra.mxu0 0.0
    %226 = vmatprep.subr.mxu0 0.0
    %227 = vmatpush1.xpose.msra.mxu0 0.0
    %228 = vmatprep.subr.mxu0 0.0
    %229 = vmatpush1.xpose.msra.mxu0 0.0
    %230 = vmatprep.subr.mxu0 0.0
    %231 = vmatpush1.xpose.msra.mxu0 0.0
    %232 = vmatprep.subr.mxu0 0.0
    %233 = vmatpush1.xpose.msra.mxu0 0.0
    %234 = vmatprep.subr.mxu0 0.0
    %235 = vmatpush1.xpose.msra.mxu0 0.0
    %236 = vmatprep.subr.mxu0 0.0
    %237 = vmatpush1.xpose.msra.mxu0 0.0
    %238 = vmatprep.subr.mxu0 0.0
    %239 = vmatpush1.xpose.msra.mxu0 0.0
    %240 = vmatprep.subr.mxu0 0.0
    %241 = vmatpush1.xpose.msra.mxu0 0.0
    %242 = vmatprep.subr.mxu0 0.0
    %243 = vmatpush1.xpose.msra.mxu0 0.0
    %244 = vmatprep.subr.mxu0 0.0
    %245 = vmatpush1.xpose.msra.mxu0 0.0
    %246 = vmatprep.subr.mxu0 0.0
    %247 = vmatpush1.xpose.msra.mxu0 0.0
    %248 = vmatprep.subr.mxu0 0.0
    %249 = vmatpush1.xpose.msra.mxu0 0.0
    %250 = vmatprep.subr.mxu0 0.0
    %251 = vmatpush1.xpose.msra.mxu0 0.0
    %252 = vmatprep.subr.mxu0 0.0
    %253 = vmatpush1.xpose.msra.mxu0 0.0
    %254 = vmatprep.mubr.f32.mxu0 0.0
    %255 = vmatmul.mubr.f32.gmra.mrb[0].mxu0 %v185
    %v256 = vpop.f32.mrb[0].mxu0
    %v257 = vadd.f32 %v188, %v256
    %v258 = vpop.f32.mrb[0].mxu0
    %259 = vdwg.mxu0
    %v260 = vlaneseq
    %v261 = vshrl.u32 %v260, 7
    %v262 = vsub.s32 0, %v261
    %v263 = vrot.slane %v257, %v262
    %264 = vmatprep.subr.bf16.mxu0 0
    %265 = vmatpush1.bf16.xpose.msra.mxu0 %v176
    %266 = vmatprep.subr.bf16.mxu0 0
    %267 = vmatpush1.bf16.xpose.msra.mxu0 %v177
    %268 = vmatprep.subr.bf16.mxu0 0
    %269 = vmatpush1.bf16.xpose.msra.mxu0 %v178
    %270 = vmatprep.subr.bf16.mxu0 0
    %271 = vmatpush1.bf16.xpose.msra.mxu0 %v179
    %272 = vmatprep.subr.bf16.mxu0 0
    %273 = vmatpush1.bf16.xpose.msra.mxu0 %v180
    %274 = vmatprep.subr.bf16.mxu0 0
    %275 = vmatpush1.bf16.xpose.msra.mxu0 %v181
    %276 = vmatprep.subr.bf16.mxu0 0
    %277 = vmatpush1.bf16.xpose.msra.mxu0 %v182
    %278 = vmatprep.subr.bf16.mxu0 0
    %279 = vmatpush1.bf16.xpose.msra.mxu0 %v183
    %280 = vmatprep.subr.bf16.mxu0 0
    %281 = vmatpush1.bf16.xpose.msra.mxu0 0
    %282 = vmatprep.subr.bf16.mxu0 0
    %283 = vmatpush1.bf16.xpose.msra.mxu0 0
    %284 = vmatprep.subr.bf16.mxu0 0
    %285 = vmatpush1.bf16.xpose.msra.mxu0 0
    %286 = vmatprep.subr.bf16.mxu0 0
    %287 = vmatpush1.bf16.xpose.msra.mxu0 0
    %288 = vmatprep.subr.bf16.mxu0 0
    %289 = vmatpush1.bf16.xpose.msra.mxu0 0
    %290 = vmatprep.subr.bf16.mxu0 0
    %291 = vmatpush1.bf16.xpose.msra.mxu0 0
    %292 = vmatprep.subr.bf16.mxu0 0
    %293 = vmatpush1.bf16.xpose.msra.mxu0 0
    %294 = vmatprep.subr.bf16.mxu0 0
    %295 = vmatpush1.bf16.xpose.msra.mxu0 0
    %296 = vmatprep.mubr.bf16.mxu0 0
    %297 = vmatmul.mubr.bf16.gmra.mrb[0].mxu0 %v175
    %v298 = vpop.f32.mrb[0].mxu0
    %v299 = vadd.f32 %v263, %v298
    %v300 = vpop.f32.mrb[0].mxu0
    %v301 = vpop.f32.mrb[0].mxu0
    %v302 = vpop.f32.mrb[0].mxu0
    %303 = vdwg.mxu0
    %304 = vst [vmem:[#allocation7] sm:$0xff] %v299
    // Predicated region
    $region22: #{tpu_custom_call.1} parent=1 // pred_check
      _
    $region23: #{tpu_custom_call.1} parent=1 // pred_check_branch
      %306 = sbr.rel (0) target = $region25
    $region24: #{tpu_custom_call.1} parent=1 // pred_region
      %s308 = ssub.s32 128, 128
      %309 = vsyncadd [#allocation4], %s308
      %s311 = sshll.u32 [#allocation7], 4
      %s312 = int_to_ptr.vmem [resolvable:$true] %s311
      %314 = dma.vmem_to_hbm [thread:$0]  %s312, 128, %s3, [#allocation4]
    $region25: #{tpu_custom_call.1} parent=1 // pred_fallthru
      _
    // Predicated region
    $region26: #{tpu_custom_call.1} parent=1 // pred_check
      _
    $region27: #{tpu_custom_call.1} parent=1 // pred_check_branch
      %316 = sbr.rel (0) target = $region29
    $region28: #{tpu_custom_call.1} parent=1 // pred_region
      %317 = dma.done [#allocation4], 128
    $region29: #{tpu_custom_call.1} parent=1 // pred_fallthru
      _
    %318 = vsyncpa [#allocation3], 1
    %319 = vsyncpa [#allocation6], 1
    %320 = vsyncpa [#allocation4], 1

</llo_original>
